<compile_context>
chip_gen: v6e
topology: v6e:2x2x1
jax: 0.10.0
libtpu: 0.0.40
codegen_flags: <defaults>
</compile_context>

<pallas_src>
import jax
import jax.numpy as jnp
from jax.experimental import pallas as pl
from jax.experimental.pallas import tpu as pltpu

LOG_MAX = 2.0
LOG_MIN = -20.0


def _round_up(x, m):
    return ((x + m - 1) // m) * m


def pack_actor_params(w1, b1, w2, b2, wm, bm, ws, bs, *, dot_dtype=jnp.float32):
    """Pack weights into one lane-aligned (R, C) buffer (stored in `dot_dtype`)
    and biases + clamp bounds into one f32 (3, C) buffer.

    Column layout (every section starts on a 128-lane boundary):
      section 0: cols [0, HP)             w1 (rows [0, s_dim)) / b1
      section 1: cols [HP, 2*HP)          w2 (rows [0, H))     / b2
      section 2: cols [2*HP, 2*HP+OUTW)   [wm | ws | 0-pad]    / [bm | bs | 0]
    b_packed row 0 = bias, row 1 = per-column clamp lower bound (-inf for mean
    columns, LOG_MIN for log_std columns), row 2 = upper bound.
    """
    s_dim, H = w1.shape
    a_dim = wm.shape[1]
    HP = _round_up(H, 128)
    OUTW = _round_up(max(2 * a_dim, 128), 128)   # keep at 128 for small a_dim
    R = _round_up(max(s_dim, HP), 8)
    C = 2 * HP + OUTW

    W = jnp.zeros((R, C), jnp.float32)
    W = W.at[:s_dim, 0:H].set(w1.astype(jnp.float32))
    W = W.at[:H, HP:HP + H].set(w2.astype(jnp.float32))
    W = W.at[:H, 2 * HP:2 * HP + a_dim].set(wm.astype(jnp.float32))
    W = W.at[:H, 2 * HP + a_dim:2 * HP + 2 * a_dim].set(ws.astype(jnp.float32))
    W = W.astype(dot_dtype)          # pre-cast once; no in-kernel weight casts

    b = jnp.zeros((3, C), jnp.float32)
    b = b.at[0, 0:H].set(b1.reshape(-1).astype(jnp.float32))
    b = b.at[0, HP:HP + H].set(b2.reshape(-1).astype(jnp.float32))
    b = b.at[0, 2 * HP:2 * HP + a_dim].set(bm.reshape(-1).astype(jnp.float32))
    b = b.at[0, 2 * HP + a_dim:2 * HP + 2 * a_dim].set(bs.reshape(-1).astype(jnp.float32))
    b = b.at[1, :].set(-jnp.inf)
    b = b.at[2, :].set(jnp.inf)
    b = b.at[1, 2 * HP + a_dim:2 * HP + 2 * a_dim].set(LOG_MIN)
    b = b.at[2, 2 * HP + a_dim:2 * HP + 2 * a_dim].set(LOG_MAX)

    return W, b, (s_dim, H, a_dim, HP, OUTW)


def _make_actor_kernel(s_dim, HP, OUTW):
    H2 = 2 * HP

    def kernel(x_ref, w_ref, b_ref, o_ref):
        dd = w_ref.dtype                                   # matmul operand dtype
        x = x_ref[...].astype(dd)                          # (bt, s_dim)

        # Layer 1: Linear -> ReLU (padded cols [H, HP) stay exactly 0).
        h = jnp.dot(x, w_ref[0:s_dim, 0:HP],
                    preferred_element_type=jnp.float32) + b_ref[0:1, 0:HP]
        h = jnp.maximum(h, 0.0)

        # Layer 2: Linear -> ReLU.
        h = jnp.dot(h.astype(dd), w_ref[0:HP, HP:H2],
                    preferred_element_type=jnp.float32) + b_ref[0:1, HP:H2]
        h = jnp.maximum(h, 0.0)

        # Fused mean/log_std heads: one matmul, one lane-dense (bt, OUTW) write.
        z = jnp.dot(h.astype(dd), w_ref[0:HP, H2:H2 + OUTW],
                    preferred_element_type=jnp.float32) + b_ref[0:1, H2:H2 + OUTW]

        # Per-column clamp via precomputed lo/hi rows: identity for the mean
        # columns (-inf/+inf bounds), [LOG_MIN, LOG_MAX] for log_std columns.
        lo = b_ref[1:2, H2:H2 + OUTW]
        hi = b_ref[2:3, H2:H2 + OUTW]
        o_ref[...] = jnp.minimum(jnp.maximum(z, lo), hi)

    return kernel


def actor_forward(x, w_packed, b_packed, dims, *, batch_tile=1024):
    """Actor.forward: returns (mean, log_std_dev), each (batch, a_dim)."""
    s_dim, H, a_dim, HP, OUTW = dims
    batch = x.shape[0]
    assert batch_tile % 8 == 0
    kernel = _make_actor_kernel(s_dim, HP, OUTW)

    flops = 2 * batch * (s_dim * HP + HP * HP + HP * OUTW)
    bytes_accessed = (x.size * x.dtype.itemsize
                      + w_packed.size * w_packed.dtype.itemsize
                      + b_packed.size * 4
                      + batch * OUTW * 4)
    ce = pl.CostEstimate(flops=flops, transcendentals=0,
                         bytes_accessed=bytes_accessed)

    if batch <= batch_tile:
        # Small batch: single gridless call, everything VMEM-resident.
        vm = pl.BlockSpec(memory_space=pltpu.MemorySpace.VMEM)
        out = pl.pallas_call(
            kernel,
            out_shape=jax.ShapeDtypeStruct((batch, OUTW), jnp.float32),
            in_specs=[vm, vm, vm],
            out_specs=vm,
            cost_estimate=ce,
        )(x, w_packed, b_packed)
    else:
        # Large batch: tile the batch axis ("parallel" -> shards across v7x's
        # two TensorCores); weights/biases stay VMEM-resident (index_map (0,0)).
        bt = batch_tile
        nt = pl.cdiv(batch, bt)
        if nt % 2 == 1:                    # keep the grid even for v7x's 2 TCs
            nt += 1
        padded = nt * bt
        x_in = x if padded == batch else jnp.pad(x, ((0, padded - batch), (0, 0)))
        out = pl.pallas_call(
            kernel,
            out_shape=jax.ShapeDtypeStruct((padded, OUTW), jnp.float32),
            grid_spec=pltpu.PrefetchScalarGridSpec(
                num_scalar_prefetch=0,
                grid=(nt,),
                in_specs=[
                    pl.BlockSpec((bt, s_dim), lambda i: (i, 0)),
                    pl.BlockSpec(w_packed.shape, lambda i: (0, 0)),
                    pl.BlockSpec(b_packed.shape, lambda i: (0, 0)),
                ],
                out_specs=pl.BlockSpec((bt, OUTW), lambda i: (i, 0)),
            ),
            compiler_params=pltpu.CompilerParams(
                dimension_semantics=("parallel",)),
            cost_estimate=ce,
        )(x_in, w_packed, b_packed)
        out = out[:batch]

    mean = out[:, :a_dim]
    log_std = out[:, a_dim:2 * a_dim]
    return mean, log_std


def init_actor_params(key, s_dim, hidden_dim, a_dim):
    """Deterministic init mimicking nn.Linear's U(-1/sqrt(fan_in), 1/sqrt(fan_in))."""
    def linear(key, fan_in, fan_out):
        kw, kb = jax.random.split(key)
        bound = 1.0 / jnp.sqrt(float(fan_in))
        w = jax.random.uniform(kw, (fan_in, fan_out), jnp.float32, -bound, bound)
        b = jax.random.uniform(kb, (1, fan_out), jnp.float32, -bound, bound)
        return w, b

    k1, k2, k3, k4 = jax.random.split(key, 4)
    w1, b1 = linear(k1, s_dim, hidden_dim)
    w2, b2 = linear(k2, hidden_dim, hidden_dim)
    wm, bm = linear(k3, hidden_dim, a_dim)
    ws, bs = linear(k4, hidden_dim, a_dim)
    return (w1, b1, w2, b2, wm, bm, ws, bs)


def actor_forward_ref(x, params):
    """Pure-JAX reference of Actor.forward for verification."""
    (w1, b1, w2, b2, wm, bm, ws, bs) = params
    h = jnp.maximum(x @ w1 + b1, 0.0)
    h = jnp.maximum(h @ w2 + b2, 0.0)
    mean = h @ wm + bm
    log_std = jnp.clip(h @ ws + bs, LOG_MIN, LOG_MAX)
    return mean, log_std


if __name__ == "__main__":
    key = jax.random.PRNGKey(0)
    k_params, k_x, k_xl = jax.random.split(key, 3)

    batch, s_dim, hidden_dim, a_dim = 8, 16, 32, 4
    params = init_actor_params(k_params, s_dim, hidden_dim, a_dim)

    # --- small batch, f32 matmul operands (gridless path) ------------------
    W32, B, dims = pack_actor_params(*params, dot_dtype=jnp.float32)
    x = jax.random.normal(k_x, (batch, s_dim), jnp.float32)
    mean, log_std = actor_forward(x, W32, B, dims)
    jax.block_until_ready((mean, log_std))

    mean_ref, log_std_ref = actor_forward_ref(x, params)
    assert mean.shape == (batch, a_dim) and log_std.shape == (batch, a_dim)
    assert jnp.allclose(mean, mean_ref, atol=1e-5, rtol=1e-5)
    assert jnp.allclose(log_std, log_std_ref, atol=1e-5, rtol=1e-5)
    assert float(jnp.max(log_std)) <= LOG_MAX and float(jnp.min(log_std)) >= LOG_MIN

    # --- small batch, bf16 matmul operands (MXU-native on v5e/v6e/v7x) -----
    W16, B16, dims16 = pack_actor_params(*params, dot_dtype=jnp.bfloat16)
    mean_bf, log_std_bf = actor_forward(x, W16, B16, dims16)
    jax.block_until_ready((mean_bf, log_std_bf))
    assert jnp.allclose(mean_bf, mean_ref, atol=5e-2, rtol=5e-2)
    assert jnp.allclose(log_std_bf, log_std_ref, atol=5e-2, rtol=5e-2)
    assert float(jnp.max(log_std_bf)) <= LOG_MAX and float(jnp.min(log_std_bf)) >= LOG_MIN

    # --- large, non-divisible batch: padded "parallel" grid (even length) --
    big_batch = 1000
    xl = jax.random.normal(k_xl, (big_batch, s_dim), jnp.float32)
    mean_l, log_std_l = actor_forward(xl, W32, B, dims, batch_tile=256)
    jax.block_until_ready((mean_l, log_std_l))
    mean_lr, log_std_lr = actor_forward_ref(xl, params)
    assert mean_l.shape == (big_batch, a_dim)
    assert jnp.allclose(mean_l, mean_lr, atol=1e-5, rtol=1e-5)
    assert jnp.allclose(log_std_l, log_std_lr, atol=1e-5, rtol=1e-5)
    assert float(jnp.max(log_std_l)) <= LOG_MAX and float(jnp.min(log_std_l)) >= LOG_MIN

    print("KERNEL_OK")
</pallas_src>

<mosaic_0001>
module attributes {stable_mosaic.version = 11 : i64} {
  func.func @kernel(%arg0: memref<8x16xf32, #tpu.memory_space<vmem>>, %arg1: memref<128x384xf32, #tpu.memory_space<vmem>>, %arg2: memref<3x384xf32, #tpu.memory_space<vmem>>, %arg3: memref<8x128xf32, #tpu.memory_space<vmem>>) attributes {dimension_semantics = [], scalar_prefetch = 0 : i64, scratch_operands = 0 : i64, tpu.core_type = #tpu.core_type<tc>} {
    %c0 = arith.constant 0 : index
    %c0_0 = arith.constant 0 : index
    %0 = vector.load %arg0[%c0, %c0_0] : memref<8x16xf32, #tpu.memory_space<vmem>>, vector<8x16xf32>
    %c0_1 = arith.constant 0 : index
    %c0_2 = arith.constant 0 : index
    %1 = vector.load %arg1[%c0_1, %c0_2] : memref<128x384xf32, #tpu.memory_space<vmem>>, vector<16x128xf32>
    %cst = arith.constant dense<0.000000e+00> : vector<8x128xf32>
    %2 = tpu.matmul %0, %1, %cst {dimension_numbers = #tpu.dot_dimension_numbers<[1], [0], [0], [1], [0, 0, 1, 1], [], []>} : vector<8x16xf32>, vector<16x128xf32>, vector<8x128xf32> -> vector<8x128xf32>
    %c0_3 = arith.constant 0 : index
    %c0_4 = arith.constant 0 : index
    %3 = vector.load %arg2[%c0_3, %c0_4] : memref<3x384xf32, #tpu.memory_space<vmem>>, vector<1x128xf32>
    %4 = vector.broadcast %3 : vector<1x128xf32> to vector<8x128xf32>
    %5 = arith.addf %2, %4 : vector<8x128xf32>
    %cst_5 = arith.constant 0.000000e+00 : f32
    %6 = vector.broadcast %cst_5 : f32 to vector<8x128xf32>
    %7 = arith.maximumf %5, %6 : vector<8x128xf32>
    %c0_6 = arith.constant 0 : index
    %c128 = arith.constant 128 : index
    %8 = vector.load %arg1[%c0_6, %c128] : memref<128x384xf32, #tpu.memory_space<vmem>>, vector<128x128xf32>
    %cst_7 = arith.constant dense<0.000000e+00> : vector<8x128xf32>
    %9 = tpu.matmul %7, %8, %cst_7 {dimension_numbers = #tpu.dot_dimension_numbers<[1], [0], [0], [1], [0, 0, 1, 1], [], []>} : vector<8x128xf32>, vector<128x128xf32>, vector<8x128xf32> -> vector<8x128xf32>
    %c0_8 = arith.constant 0 : index
    %c128_9 = arith.constant 128 : index
    %10 = vector.load %arg2[%c0_8, %c128_9] : memref<3x384xf32, #tpu.memory_space<vmem>>, vector<1x128xf32>
    %11 = vector.broadcast %10 : vector<1x128xf32> to vector<8x128xf32>
    %12 = arith.addf %9, %11 : vector<8x128xf32>
    %cst_10 = arith.constant 0.000000e+00 : f32
    %13 = vector.broadcast %cst_10 : f32 to vector<8x128xf32>
    %14 = arith.maximumf %12, %13 : vector<8x128xf32>
    %c0_11 = arith.constant 0 : index
    %c256 = arith.constant 256 : index
    %15 = vector.load %arg1[%c0_11, %c256] : memref<128x384xf32, #tpu.memory_space<vmem>>, vector<128x128xf32>
    %cst_12 = arith.constant dense<0.000000e+00> : vector<8x128xf32>
    %16 = tpu.matmul %14, %15, %cst_12 {dimension_numbers = #tpu.dot_dimension_numbers<[1], [0], [0], [1], [0, 0, 1, 1], [], []>} : vector<8x128xf32>, vector<128x128xf32>, vector<8x128xf32> -> vector<8x128xf32>
    %c0_13 = arith.constant 0 : index
    %c256_14 = arith.constant 256 : index
    %17 = vector.load %arg2[%c0_13, %c256_14] : memref<3x384xf32, #tpu.memory_space<vmem>>, vector<1x128xf32>
    %18 = vector.broadcast %17 : vector<1x128xf32> to vector<8x128xf32>
    %19 = arith.addf %16, %18 : vector<8x128xf32>
    %c1 = arith.constant 1 : index
    %c256_15 = arith.constant 256 : index
    %20 = vector.load %arg2[%c1, %c256_15] : memref<3x384xf32, #tpu.memory_space<vmem>>, vector<1x128xf32>
    %c2 = arith.constant 2 : index
    %c256_16 = arith.constant 256 : index
    %21 = vector.load %arg2[%c2, %c256_16] : memref<3x384xf32, #tpu.memory_space<vmem>>, vector<1x128xf32>
    %22 = vector.broadcast %20 : vector<1x128xf32> to vector<8x128xf32>
    %23 = arith.maximumf %19, %22 : vector<8x128xf32>
    %24 = vector.broadcast %21 : vector<1x128xf32> to vector<8x128xf32>
    %25 = arith.minimumf %23, %24 : vector<8x128xf32>
    %c0_17 = arith.constant 0 : index
    %c0_18 = arith.constant 0 : index
    %26 = vector.load %arg3[%c0_17, %c0_18] : memref<8x128xf32, #tpu.memory_space<vmem>>, vector<8x128xf32>
    tpu.vector_store %arg3[%c0_17, %c0_18], %25 {strides = array<i32>} : memref<8x128xf32, #tpu.memory_space<vmem>>, vector<8x128xf32>,
    return
  }
}

</mosaic_0001>

<llo_original>
// kernel: tpu_custom_call.1
$region0: #{tpu_custom_call.1}
  #allocation0 [shape = 'u32[]', space=smem, size = 0x4, offset = 0x4, fixed_abs, tag = 'smem constant byte address 0x4 - core index']
  #allocation1 [shape = 'u32[144,128]{1,0:T(1,128)}', space=vmem, size = 0x12000, scoped, tag = 'internal scratch']
  %s0 = inlined_call_operand.hbm [shape: f32[8,16], index: 0, kind: input, shape index: {}]
  %s1 = inlined_call_operand.hbm [shape: f32[128,384], index: 1, kind: input, shape index: {}]
  %s2 = inlined_call_operand.hbm [shape: f32[3,384], index: 2, kind: input, shape index: {}]
  %s3 = inlined_call_operand.hbm [shape: f32[8,128], index: 3, kind: output, shape index: {}]
  %s4 = sld [smem:[#allocation0]]
  $region34: #{tpu_custom_call.1} parent=0
    _
  %s6 = ssub.s32 1, %s4
  %s7 = scalar_select 0, %s6, %s4
  $region1: #{tpu_custom_call.1} parent=0
    #allocation2 [shape = 'u8[4096]{0}', space=vmem, size = 0x1000, scoped, tag = 'input window, operand 0, single buffered']
    #allocation3 [shape = 's32[1]{0}', space=sflag, size = 0x4, scoped, tag = 'scoped memory for tpu_custom_call.1']
    #allocation4 [shape = 's32[1]{0}', space=sflag, size = 0x4, scoped, tag = 'scoped memory for tpu_custom_call.1']
    #allocation5 [shape = 'u8[196608]{0}', space=vmem, size = 0x30000, scoped, tag = 'input window, operand 1, single buffered']
    #allocation6 [shape = 's32[1]{0}', space=sflag, size = 0x4, scoped, tag = 'scoped memory for tpu_custom_call.1']
    #allocation7 [shape = 'u8[6144]{0}', space=vmem, size = 0x1800, scoped, tag = 'input window, operand 2, single buffered']
    #allocation8 [shape = 'u8[4096]{0}', space=vmem, size = 0x1000, scoped, tag = 'output window, operand 0, single buffered']
    %8 = vsyncpa [#allocation3], 0
    %9 = vsyncpa [#allocation6], 0
    %10 = vsyncpa [#allocation4], 0
    // Predicated region
    $region2: #{tpu_custom_call.1} parent=1 // pred_check
      _
    $region3: #{tpu_custom_call.1} parent=1 // pred_check_branch
      %12 = sbr.rel (0) target = $region5
    $region4: #{tpu_custom_call.1} parent=1 // pred_region
      %s14 = ssub.s32 128, 128
      %15 = vsyncadd [#allocation3], %s14
      %s17 = sshll.u32 [#allocation2], 4
      %s18 = int_to_ptr.vmem [resolvable:$true] %s17
      %20 = dma.hbm_to_vmem [thread:$0]  %s0, 128, %s18, [#allocation3]
    $region5: #{tpu_custom_call.1} parent=1 // pred_fallthru
      _
    // Predicated region
    $region6: #{tpu_custom_call.1} parent=1 // pred_check
      _
    $region7: #{tpu_custom_call.1} parent=1 // pred_check_branch
      %22 = sbr.rel (0) target = $region9
    $region8: #{tpu_custom_call.1} parent=1 // pred_region
      %s24 = ssub.s32 6144, 6144
      %25 = vsyncadd [#allocation6], %s24
      %s26 = sshll.u32 [#allocation5], 4
      %s27 = int_to_ptr.vmem [resolvable:$true] %s26
      %32 = dma.hbm_to_vmem [thread:$0]  %s1, 6144, %s27, [#allocation6], 384, 384, 24
    $region9: #{tpu_custom_call.1} parent=1 // pred_fallthru
      _
    // Predicated region
    $region10: #{tpu_custom_call.1} parent=1 // pred_check
      _
    $region11: #{tpu_custom_call.1} parent=1 // pred_check_branch
      %34 = sbr.rel (0) target = $region13
    $region12: #{tpu_custom_call.1} parent=1 // pred_region
      %s36 = ssub.s32 192, 192
      %37 = vsyncadd [#allocation6], %s36
      %s39 = sshll.u32 [#allocation7], 4
      %s40 = int_to_ptr.vmem [resolvable:$true] %s39
      %42 = dma.hbm_to_vmem [thread:$0]  %s2, 192, %s40, [#allocation6]
    $region13: #{tpu_custom_call.1} parent=1 // pred_fallthru
      _
    // Predicated region
    $region14: #{tpu_custom_call.1} parent=1 // pred_check
      _
    $region15: #{tpu_custom_call.1} parent=1 // pred_check_branch
      %44 = sbr.rel (0) target = $region17
    $region16: #{tpu_custom_call.1} parent=1 // pred_region
      %45 = dma.done [#allocation3], 128
    $region17: #{tpu_custom_call.1} parent=1 // pred_fallthru
      _
    // Predicated region
    $region18: #{tpu_custom_call.1} parent=1 // pred_check
      _
    $region19: #{tpu_custom_call.1} parent=1 // pred_check_branch
      %47 = sbr.rel (0) target = $region21
    $region20: #{tpu_custom_call.1} parent=1 // pred_region
      %48 = dma.done [#allocation6], 6144
    $region21: #{tpu_custom_call.1} parent=1 // pred_fallthru
      _
    // Predicated region
    $region22: #{tpu_custom_call.1} parent=1 // pred_check
      _
    $region23: #{tpu_custom_call.1} parent=1 // pred_check_branch
      %50 = sbr.rel (0) target = $region25
    $region24: #{tpu_custom_call.1} parent=1 // pred_region
      %51 = dma.done [#allocation6], 192
    $region25: #{tpu_custom_call.1} parent=1 // pred_fallthru
      _
    %v52 = vld [vmem:[#allocation2] sm:$0xff]
    %v53 = vld [vmem:[#allocation5] sm:$0xff]
    %v54 = vld [vmem:[#allocation5 + $0x18] sm:$0xff]
    %v55 = vld [vmem:[#allocation7] sm:$0x1]
    %v56 = vlaneseq
    %v57 = vshrl.u32 %v56, 7
    %v58 = vsub.s32 0, %v57
    %v59 = vrot.slane %v55, %v58
    %vm60 = vcmask 130048
    %v62 = vsel %vm60, %v52, 0
    %64 = vmatprep.subr.mxu0 0.0
    %65 = vmatpush1.msra.mxu0 0.0
    %66 = vmatprep.subr.mxu0 0.0
    %67 = vmatpush1.msra.mxu0 0.0
    %68 = vmatprep.subr.mxu0 0.0
    %69 = vmatpush1.msra.mxu0 0.0
    %70 = vmatprep.subr.mxu0 0.0
    %71 = vmatpush1.msra.mxu0 0.0
    %72 = vmatprep.subr.mxu0 0.0
    %73 = vmatpush1.msra.mxu0 0.0
    %74 = vmatprep.subr.mxu0 0.0
    %75 = vmatpush1.msra.mxu0 0.0
    %76 = vmatprep.subr.mxu0 0.0
    %77 = vmatpush1.msra.mxu0 0.0
    %78 = vmatprep.subr.mxu0 0.0
    %79 = vmatpush1.msra.mxu0 0.0
    %80 = vmatprep.subr.mxu0 0.0
    %81 = vmatpush1.msra.mxu0 0.0
    %82 = vmatprep.subr.mxu0 0.0
    %83 = vmatpush1.msra.mxu0 0.0
    %84 = vmatprep.subr.mxu0 0.0
    %85 = vmatpush1.msra.mxu0 0.0
    %86 = vmatprep.subr.mxu0 0.0
    %87 = vmatpush1.msra.mxu0 0.0
    %88 = vmatprep.subr.mxu0 0.0
    %89 = vmatpush1.msra.mxu0 0.0
    %90 = vmatprep.subr.mxu0 0.0
    %91 = vmatpush1.msra.mxu0 0.0
    %92 = vmatprep.subr.mxu0 0.0
    %93 = vmatpush1.msra.mxu0 %v54
    %94 = vmatprep.subr.mxu0 0.0
    %95 = vmatpush1.msra.mxu0 %v53
    %96 = vmatprep.subr.mxu0 0.0
    %97 = vmatpush2.msra.mxu0 0.0
    %98 = vmatprep.subr.mxu0 0.0
    %99 = vmatpush2.msra.mxu0 0.0
    %100 = vmatprep.subr.mxu0 0.0
    %101 = vmatpush2.msra.mxu0 0.0
    %102 = vmatprep.subr.mxu0 0.0
    %103 = vmatpush2.msra.mxu0 0.0
    %104 = vmatprep.subr.mxu0 0.0
    %105 = vmatpush2.msra.mxu0 0.0
    %106 = vmatprep.subr.mxu0 0.0
    %107 = vmatpush2.msra.mxu0 0.0
    %108 = vmatprep.subr.mxu0 0.0
    %109 = vmatpush2.msra.mxu0 0.0
    %110 = vmatprep.subr.mxu0 0.0
    %111 = vmatpush2.msra.mxu0 0.0
    %112 = vmatprep.subr.mxu0 0.0
    %113 = vmatpush2.msra.mxu0 0.0
    %114 = vmatprep.subr.mxu0 0.0
    %115 = vmatpush2.msra.mxu0 0.0
    %116 = vmatprep.subr.mxu0 0.0
    %117 = vmatpush2.msra.mxu0 0.0
    %118 = vmatprep.subr.mxu0 0.0
    %119 = vmatpush2.msra.mxu0 0.0
    %120 = vmatprep.subr.mxu0 0.0
    %121 = vmatpush2.msra.mxu0 0.0
    %122 = vmatprep.subr.mxu0 0.0
    %123 = vmatpush2.msra.mxu0 0.0
    %124 = vmatprep.subr.mxu0 0.0
    %125 = vmatpush2.msra.mxu0 0.0
    %126 = vmatprep.subr.mxu0 0.0
    %127 = vmatpush2.msra.mxu0 0.0
    %128 = vmatprep.mubr.f32.mxu0 0.0
    %129 = vmatmul.mubr.f32.gmra.mxu0 %v62
    %v130 = vpop.f32.mrf.mxu0
    %v131 = vadd.f32 %v59, %v130
    %v132 = vpop.f32.mrf.mxu0
    %133 = vdwg.mxu0
    %v134 = vmax.f32 %v131, 0.0
    %v135 = vld [vmem:[#allocation5 + $0x8] sm:$0xff]
    %v136 = vld [vmem:[#allocation5 + $0x20] sm:$0xff]
    %v137 = vld [vmem:[#allocation5 + $0x38] sm:$0xff]
    %v138 = vld [vmem:[#allocation5 + $0x50] sm:$0xff]
    %v139 = vld [vmem:[#allocation5 + $0x68] sm:$0xff]
    %v140 = vld [vmem:[#allocation5 + $0x80] sm:$0xff]
    %v141 = vld [vmem:[#allocation5 + $0x98] sm:$0xff]
    %v142 = vld [vmem:[#allocation5 + $0xb0] sm:$0xff]
    %v143 = vld [vmem:[#allocation5 + $0xc8] sm:$0xff]
    %v144 = vld [vmem:[#allocation5 + $0xe0] sm:$0xff]
    %v145 = vld [vmem:[#allocation5 + $0xf8] sm:$0xff]
    %v146 = vld [vmem:[#allocation5 + $0x110] sm:$0xff]
    %v147 = vld [vmem:[#allocation5 + $0x128] sm:$0xff]
    %v148 = vld [vmem:[#allocation5 + $0x140] sm:$0xff]
    %v149 = vld [vmem:[#allocation5 + $0x158] sm:$0xff]
    %v150 = vld [vmem:[#allocation5 + $0x170] sm:$0xff]
    %v151 = vld [vmem:[#allocation7 + $0x4] sm:$0x1]
    %v152 = vlaneseq
    %v153 = vshrl.u32 %v152, 7
    %v154 = vsub.s32 0, %v153
    %v155 = vrot.slane %v151, %v154
    %156 = vmatprep.subr.mxu0 0.0
    %157 = vmatpush1.msra.mxu0 %v150
    %158 = vmatprep.subr.mxu0 0.0
    %159 = vmatpush1.msra.mxu0 %v149
    %160 = vmatprep.subr.mxu0 0.0
    %161 = vmatpush1.msra.mxu0 %v148
    %162 = vmatprep.subr.mxu0 0.0
    %163 = vmatpush1.msra.mxu0 %v147
    %164 = vmatprep.subr.mxu0 0.0
    %165 = vmatpush1.msra.mxu0 %v146
    %166 = vmatprep.subr.mxu0 0.0
    %167 = vmatpush1.msra.mxu0 %v145
    %168 = vmatprep.subr.mxu0 0.0
    %169 = vmatpush1.msra.mxu0 %v144
    %170 = vmatprep.subr.mxu0 0.0
    %171 = vmatpush1.msra.mxu0 %v143
    %172 = vmatprep.subr.mxu0 0.0
    %173 = vmatpush1.msra.mxu0 %v142
    %174 = vmatprep.subr.mxu0 0.0
    %175 = vmatpush1.msra.mxu0 %v141
    %176 = vmatprep.subr.mxu0 0.0
    %177 = vmatpush1.msra.mxu0 %v140
    %178 = vmatprep.subr.mxu0 0.0
    %179 = vmatpush1.msra.mxu0 %v139
    %180 = vmatprep.subr.mxu0 0.0
    %181 = vmatpush1.msra.mxu0 %v138
    %182 = vmatprep.subr.mxu0 0.0
    %183 = vmatpush1.msra.mxu0 %v137
    %184 = vmatprep.subr.mxu0 0.0
    %185 = vmatpush1.msra.mxu0 %v136
    %186 = vmatprep.subr.mxu0 0.0
    %187 = vmatpush1.msra.mxu0 %v135
    %188 = vmatprep.subr.mxu0 0.0
    %189 = vmatpush2.msra.mxu0 0.0
    %190 = vmatprep.subr.mxu0 0.0
    %191 = vmatpush2.msra.mxu0 0.0
    %192 = vmatprep.subr.mxu0 0.0
    %193 = vmatpush2.msra.mxu0 0.0
    %194 = vmatprep.subr.mxu0 0.0
    %195 = vmatpush2.msra.mxu0 0.0
    %196 = vmatprep.subr.mxu0 0.0
    %197 = vmatpush2.msra.mxu0 0.0
    %198 = vmatprep.subr.mxu0 0.0
    %199 = vmatpush2.msra.mxu0 0.0
    %200 = vmatprep.subr.mxu0 0.0
    %201 = vmatpush2.msra.mxu0 0.0
    %202 = vmatprep.subr.mxu0 0.0
    %203 = vmatpush2.msra.mxu0 0.0
    %204 = vmatprep.subr.mxu0 0.0
    %205 = vmatpush2.msra.mxu0 0.0
    %206 = vmatprep.subr.mxu0 0.0
    %207 = vmatpush2.msra.mxu0 0.0
    %208 = vmatprep.subr.mxu0 0.0
    %209 = vmatpush2.msra.mxu0 0.0
    %210 = vmatprep.subr.mxu0 0.0
    %211 = vmatpush2.msra.mxu0 0.0
    %212 = vmatprep.subr.mxu0 0.0
    %213 = vmatpush2.msra.mxu0 0.0
    %214 = vmatprep.subr.mxu0 0.0
    %215 = vmatpush2.msra.mxu0 0.0
    %216 = vmatprep.subr.mxu0 0.0
    %217 = vmatpush2.msra.mxu0 0.0
    %218 = vmatprep.subr.mxu0 0.0
    %219 = vmatpush2.msra.mxu0 0.0
    %220 = vmatprep.mubr.f32.mxu0 0.0
    %221 = vmatmul.mubr.f32.gmra.mxu0 %v134
    %v222 = vpop.f32.mrf.mxu0
    %v223 = vadd.f32 %v155, %v222
    %v224 = vpop.f32.mrf.mxu0
    %225 = vdwg.mxu0
    %v226 = vmax.f32 %v223, 0.0
    %v227 = vld [vmem:[#allocation5 + $0x10] sm:$0xff]
    %v228 = vld [vmem:[#allocation5 + $0x28] sm:$0xff]
    %v229 = vld [vmem:[#allocation5 + $0x40] sm:$0xff]
    %v230 = vld [vmem:[#allocation5 + $0x58] sm:$0xff]
    %v231 = vld [vmem:[#allocation5 + $0x70] sm:$0xff]
    %v232 = vld [vmem:[#allocation5 + $0x88] sm:$0xff]
    %v233 = vld [vmem:[#allocation5 + $0xa0] sm:$0xff]
    %v234 = vld [vmem:[#allocation5 + $0xb8] sm:$0xff]
    %v235 = vld [vmem:[#allocation5 + $0xd0] sm:$0xff]
    %v236 = vld [vmem:[#allocation5 + $0xe8] sm:$0xff]
    %v237 = vld [vmem:[#allocation5 + $0x100] sm:$0xff]
    %v238 = vld [vmem:[#allocation5 + $0x118] sm:$0xff]
    %v239 = vld [vmem:[#allocation5 + $0x130] sm:$0xff]
    %v240 = vld [vmem:[#allocation5 + $0x148] sm:$0xff]
    %v241 = vld [vmem:[#allocation5 + $0x160] sm:$0xff]
    %v242 = vld [vmem:[#allocation5 + $0x178] sm:$0xff]
    %v243 = vld [vmem:[#allocation7 + $0x8] sm:$0x1]
    %v244 = vlaneseq
    %v245 = vshrl.u32 %v244, 7
    %v246 = vsub.s32 0, %v245
    %v247 = vrot.slane %v243, %v246
    %248 = vmatprep.subr.mxu0 0.0
    %249 = vmatpush1.msra.mxu0 %v242
    %250 = vmatprep.subr.mxu0 0.0
    %251 = vmatpush1.msra.mxu0 %v241
    %252 = vmatprep.subr.mxu0 0.0
    %253 = vmatpush1.msra.mxu0 %v240
    %254 = vmatprep.subr.mxu0 0.0
    %255 = vmatpush1.msra.mxu0 %v239
    %256 = vmatprep.subr.mxu0 0.0
    %257 = vmatpush1.msra.mxu0 %v238
    %258 = vmatprep.subr.mxu0 0.0
    %259 = vmatpush1.msra.mxu0 %v237
    %260 = vmatprep.subr.mxu0 0.0
    %261 = vmatpush1.msra.mxu0 %v236
    %262 = vmatprep.subr.mxu0 0.0
    %263 = vmatpush1.msra.mxu0 %v235
    %264 = vmatprep.subr.mxu0 0.0
    %265 = vmatpush1.msra.mxu0 %v234
    %266 = vmatprep.subr.mxu0 0.0
    %267 = vmatpush1.msra.mxu0 %v233
    %268 = vmatprep.subr.mxu0 0.0
    %269 = vmatpush1.msra.mxu0 %v232
    %270 = vmatprep.subr.mxu0 0.0
    %271 = vmatpush1.msra.mxu0 %v231
    %272 = vmatprep.subr.mxu0 0.0
    %273 = vmatpush1.msra.mxu0 %v230
    %274 = vmatprep.subr.mxu0 0.0
    %275 = vmatpush1.msra.mxu0 %v229
    %276 = vmatprep.subr.mxu0 0.0
    %277 = vmatpush1.msra.mxu0 %v228
    %278 = vmatprep.subr.mxu0 0.0
    %279 = vmatpush1.msra.mxu0 %v227
    %280 = vmatprep.subr.mxu0 0.0
    %281 = vmatpush2.msra.mxu0 0.0
    %282 = vmatprep.subr.mxu0 0.0
    %283 = vmatpush2.msra.mxu0 0.0
    %284 = vmatprep.subr.mxu0 0.0
    %285 = vmatpush2.msra.mxu0 0.0
    %286 = vmatprep.subr.mxu0 0.0
    %287 = vmatpush2.msra.mxu0 0.0
    %288 = vmatprep.subr.mxu0 0.0
    %289 = vmatpush2.msra.mxu0 0.0
    %290 = vmatprep.subr.mxu0 0.0
    %291 = vmatpush2.msra.mxu0 0.0
    %292 = vmatprep.subr.mxu0 0.0
    %293 = vmatpush2.msra.mxu0 0.0
    %294 = vmatprep.subr.mxu0 0.0
    %295 = vmatpush2.msra.mxu0 0.0
    %296 = vmatprep.subr.mxu0 0.0
    %297 = vmatpush2.msra.mxu0 0.0
    %298 = vmatprep.subr.mxu0 0.0
    %299 = vmatpush2.msra.mxu0 0.0
    %300 = vmatprep.subr.mxu0 0.0
    %301 = vmatpush2.msra.mxu0 0.0
    %302 = vmatprep.subr.mxu0 0.0
    %303 = vmatpush2.msra.mxu0 0.0
    %304 = vmatprep.subr.mxu0 0.0
    %305 = vmatpush2.msra.mxu0 0.0
    %306 = vmatprep.subr.mxu0 0.0
    %307 = vmatpush2.msra.mxu0 0.0
    %308 = vmatprep.subr.mxu0 0.0
    %309 = vmatpush2.msra.mxu0 0.0
    %310 = vmatprep.subr.mxu0 0.0
    %311 = vmatpush2.msra.mxu0 0.0
    %312 = vmatprep.mubr.f32.mxu0 0.0
    %313 = vmatmul.mubr.f32.gmra.mxu0 %v226
    %v314 = vpop.f32.mrf.mxu0
    %v315 = vadd.f32 %v247, %v314
    %v316 = vpop.f32.mrf.mxu0
    %317 = vdwg.mxu0
    %v318 = vld [vmem:[#allocation7 + $0x9] sm:$0x1]
    %v319 = vld [vmem:[#allocation7 + $0xa] sm:$0x1]
    %v320 = vlaneseq
    %v321 = vshrl.u32 %v320, 7
    %v322 = vsub.s32 0, %v321
    %v323 = vrot.slane %v318, %v322
    %v324 = vmax.f32 %v315, %v323
    %v325 = vlaneseq
    %v326 = vshrl.u32 %v325, 7
    %v327 = vsub.s32 0, %v326
    %v328 = vrot.slane %v319, %v327
    %v329 = vmin.f32 %v324, %v328
    %330 = vst [vmem:[#allocation8] sm:$0xff] %v329
    // Predicated region
    $region26: #{tpu_custom_call.1} parent=1 // pred_check
      _
    $region27: #{tpu_custom_call.1} parent=1 // pred_check_branch
      %332 = sbr.rel (0) target = $region29
    $region28: #{tpu_custom_call.1} parent=1 // pred_region
      %s334 = ssub.s32 128, 128
      %335 = vsyncadd [#allocation4], %s334
      %s337 = sshll.u32 [#allocation8], 4
      %s338 = int_to_ptr.vmem [resolvable:$true] %s337
      %340 = dma.vmem_to_hbm [thread:$0]  %s338, 128, %s3, [#allocation4]
    $region29: #{tpu_custom_call.1} parent=1 // pred_fallthru
      _
    // Predicated region
    $region30: #{tpu_custom_call.1} parent=1 // pred_check
      _
    $region31: #{tpu_custom_call.1} parent=1 // pred_check_branch
      %342 = sbr.rel (0) target = $region33
    $region32: #{tpu_custom_call.1} parent=1 // pred_region
      %343 = dma.done [#allocation4], 128
    $region33: #{tpu_custom_call.1} parent=1 // pred_fallthru
      _
    %344 = vsyncpa [#allocation3], 1
    %345 = vsyncpa [#allocation6], 1
    %346 = vsyncpa [#allocation4], 1

</llo_original>
